<compile_context>
chip_gen: v7x
topology: tpu7x:2x2x1
jax: 0.10.0
libtpu: 0.0.40
codegen_flags: <defaults>
</compile_context>

<pallas_src>
import functools

import jax
import jax.numpy as jnp
from jax.experimental import pallas as pl
from jax.experimental.pallas import tpu as pltpu


def _round_up(x, m):
    return ((x + m - 1) // m) * m


def _global_attention_kernel(b_row_ref, x_ref, wf_ref, out_ref, m_ref,
                             *, gate_col, ones_col, neg_big):
    t = pl.program_id(1)
    n_t = pl.num_programs(1)
    tn = x_ref.shape[0]
    num_g = out_ref.shape[0]          # padded graph rows (multiple of 8, incl. dump row)
    cp = out_ref.shape[1]             # lane-dense fused-column width (multiple of 128)

    @pl.when(t == 0)
    def _init():
        m_ref[...] = jnp.full(m_ref.shape, neg_big, jnp.float32)
        out_ref[...] = jnp.zeros(out_ref.shape, jnp.float32)

    # Fused projection (bias folded in via the appended ones feature of x):
    #   columns = [gate | exp-carrier (==1.0) | h_theta channel chunk | zero pad]
    hf = jnp.dot(x_ref[...], wf_ref[...], preferred_element_type=jnp.float32)   # [tn, cp] f32

    # Gate logits as a lane-major row: one-hot selector contracted against hf's last
    # dim on the MXU (NT dot_general) -- no VPU/XLU lane-select, no relayout.
    sel_gate = (jax.lax.broadcasted_iota(jnp.int32, (1, cp), 1) == gate_col
                ).astype(jnp.float32)                                            # [1, cp]
    gate_row = jax.lax.dot_general(sel_gate, hf, (((1,), (1,)), ((), ())),
                                   preferred_element_type=jnp.float32)          # [1, tn]

    # One-hot graph membership, graph-major only.
    b_row = b_row_ref[...]                                                       # [1, tn] int32
    mask = b_row == jax.lax.broadcasted_iota(jnp.int32, (num_g, tn), 0)          # [num_g, tn]
    maskf = mask.astype(jnp.float32)

    # Online (flash-style) per-graph running max, kept as a column.
    m_old = m_ref[...]                                                           # [num_g, 1]
    tile_max = jnp.max(jnp.where(mask, gate_row, neg_big), axis=1, keepdims=True)
    m_new = jnp.maximum(m_old, tile_max)                                         # [num_g, 1]
    m_ref[...] = m_new

    # Per-node running max gathered through the one-hot mask on the MXU
    # (transposed-lhs / TN dot_general: contract the graph axis of both operands).
    node_max = jax.lax.dot_general(m_new, maskf, (((0,), (0,)), ((), ())),
                                   preferred_element_type=jnp.float32)          # [1, tn]
    expg = jnp.exp(gate_row - node_max)                                          # [1, tn] <= 1

    # Fold the attention weights into the pooling mask (cheaper than scaling hf when
    # num_g < cp), then pool with a single MXU matmul.  The exp-carrier column of hf is
    # exactly 1.0, so the same matmul also accumulates the softmax denominator.
    contrib = jnp.dot(maskf * expg, hf, preferred_element_type=jnp.float32)      # [num_g, cp]

    # Rescale previously accumulated tiles to the new running max, in place.
    corr = jnp.exp(m_old - m_new)                                                # [num_g, 1]
    out_ref[...] = corr * out_ref[...] + contrib

    @pl.when(t == n_t - 1)
    def _finalize():
        acc = out_ref[...]                                                       # [num_g, cp]
        sel_ones = (jax.lax.broadcasted_iota(jnp.int32, (cp, 1), 0) == ones_col
                    ).astype(jnp.float32)                                        # [cp, 1]
        denom = jnp.dot(acc, sel_ones,
                        preferred_element_type=jnp.float32) + jnp.float32(1e-16) # [num_g, 1]
        out_ref[...] = acc * pl.reciprocal(denom, approx=False)


def global_attention(x, batch, wg, bg, w, b, num_graphs, *, tile_n=None, tile_c=None,
                     mxu_dtype=jnp.bfloat16, vmem_limit_bytes=None):
    """GlobalAttention forward (gate_nn=Linear(F,1), nn=Linear(F,C)) on TPU via Pallas.

    x: [N, F] f32, batch: [N] int graph ids in [0, num_graphs), wg: [F,1], bg: [1,1],
    w: [F,C], b: [1,C].  Returns [num_graphs, C] f32.
    mxu_dtype: operand dtype of the big streaming matmul (bf16 recommended; all softmax
    math, masks and accumulation stay f32).  Pass jnp.float32 for strict accuracy.
    """
    N, F = x.shape
    C = w.shape[1]
    G = int(num_graphs)

    Gp = _round_up(G + 1, 8)          # +1 dump row that absorbs padded nodes
    dump_id = G

    # Column tiling: each tile carries [gate | exp-carrier | channel chunk | pad].
    if tile_c is None:
        tile_c = min(_round_up(C + 2, 128), 512)
    assert tile_c % 128 == 0 and tile_c >= 128
    chunk = tile_c - 2
    n_ctiles = -(-C // chunk)
    Cp = n_ctiles * tile_c

    Fa = F + 1                        # appended ones feature carries the biases

    wf = jnp.zeros((Fa, n_ctiles, tile_c), jnp.float32)
    for j in range(n_ctiles):
        lo = j * chunk
        width = min(C, lo + chunk) - lo
        wf = wf.at[:F, j, 0].set(wg[:, 0])
        wf = wf.at[F, j, 0].set(bg[0, 0])
        wf = wf.at[F, j, 1].set(1.0)
        wf = wf.at[:F, j, 2:2 + width].set(w[:, lo:lo + width])
        wf = wf.at[F, j, 2:2 + width].set(b[0, lo:lo + width])
    wf = wf.reshape(Fa, Cp).astype(mxu_dtype)

    itemsize = jnp.dtype(mxu_dtype).itemsize

    # ---- generation-aware VMEM budget / tile-size selection -------------------------
    try:
        vmem_cap = int(pltpu.get_tpu_info().vmem_capacity_bytes)
    except Exception:
        vmem_cap = 64 * 1024 * 1024               # conservative (v7x-sized) fallback
    budget = vmem_cap // 3                        # headroom for compiler temps / spills
    if vmem_limit_bytes is None:
        vmem_limit_bytes = min(vmem_cap * 3 // 4, 128 * 1024 * 1024)

    def _vmem_bytes(tn):
        def pad(v, m):
            return -(-v // m) * m
        blocks = (2 * 8 * pad(tn, 128) * 4                    # batch row ids (2 bufs, padded)
                  + 2 * pad(tn, 8) * pad(Fa, 128) * itemsize  # x tile (2 bufs, lane-padded)
                  + 1 * pad(Fa, 8) * tile_c * itemsize        # fused weights (Buffered(1))
                  + 2 * Gp * tile_c * 4                       # output block (2 bufs)
                  + Gp * 128 * 4)                             # running-max scratch
        temps = (2 * pad(tn, 8) * tile_c * 4                  # hf + slack
                 + 3 * Gp * pad(tn, 128) * 4                  # mask / where / weighted mask
                 + Gp * tile_c * 4)                           # contrib
        return blocks + temps

    tn_cap = max(128, _round_up(N, 128))
    if tile_n is None:
        tile_n = 128
        while tile_n * 2 <= min(4096, tn_cap):
            tile_n *= 2
        while tile_n > 128 and _vmem_bytes(tile_n) > budget:
            tile_n //= 2
    assert tile_n % 128 == 0, "tile_n must be a multiple of 128"

    Np = _round_up(N, tile_n)
    x_aug = jnp.concatenate([x.astype(jnp.float32), jnp.ones((N, 1), jnp.float32)], axis=1)
    batch_i = batch.astype(jnp.int32).reshape(N)
    if Np != N:
        x_aug = jnp.pad(x_aug, ((0, Np - N), (0, 0)))     # padded nodes: all-zero features
        batch_i = jnp.concatenate([batch_i, jnp.full((Np - N,), dump_id, jnp.int32)])
    x_aug = x_aug.astype(mxu_dtype)
    batch_row = batch_i.reshape(1, Np)

    n_tiles = Np // tile_n
    kernel = functools.partial(_global_attention_kernel,
                               gate_col=0, ones_col=1, neg_big=-1e30)

    out_full = pl.pallas_call(
        kernel,
        out_shape=jax.ShapeDtypeStruct((Gp, Cp), jnp.float32),
        grid=(n_ctiles, n_tiles),
        in_specs=[
            pl.BlockSpec((1, tile_n), lambda c, t: (0, t)),      # batch ids, lane-major
            pl.BlockSpec((tile_n, Fa), lambda c, t: (t, 0)),     # x tile (+ ones feature)
            pl.BlockSpec((Fa, tile_c), lambda c, t: (0, c),
                         pipeline_mode=pl.Buffered(1)),          # fused weights (per ctile)
        ],
        out_specs=pl.BlockSpec((Gp, tile_c), lambda c, t: (0, c)),   # resident accumulator
        scratch_shapes=[
            pltpu.VMEM((Gp, 1), jnp.float32),                    # per-graph running max
        ],
        compiler_params=pltpu.CompilerParams(
            dimension_semantics=("parallel", "arbitrary"),       # ctiles parallel, nodes reduce
            vmem_limit_bytes=int(vmem_limit_bytes),
        ),
    )(batch_row, x_aug, wf)

    out = out_full.reshape(Gp, n_ctiles, tile_c)[:, :, 2:]
    return out.reshape(Gp, n_ctiles * chunk)[:G, :C]


def reference(x, batch, wg, bg, w, b, num_graphs):
    gate = x @ wg + bg                                                   # [N, 1]
    h = x @ w + b                                                        # [N, C]
    seg_max = jax.ops.segment_max(gate, batch, num_segments=num_graphs)  # [G, 1]
    gate = gate - seg_max[batch]
    expg = jnp.exp(gate)
    seg_sum = jax.ops.segment_sum(expg, batch, num_segments=num_graphs)  # [G, 1]
    attn = expg / (seg_sum[batch] + 1e-16)
    return jax.ops.segment_sum(attn * h, batch, num_segments=num_graphs)


if __name__ == "__main__":
    N, F, C, G = 256, 16, 32, 4   # 256 nodes, 16 in-channels, 32 out-channels, 4 graphs

    key = jax.random.PRNGKey(0)
    kx, kwg, kbg, kw, kb = jax.random.split(key, 5)

    x = jax.random.normal(kx, (N, F), dtype=jnp.float32)
    batch = jnp.repeat(jnp.arange(G, dtype=jnp.int32), N // G)           # graph ids

    wg = jax.random.normal(kwg, (F, 1), dtype=jnp.float32) * 0.1
    bg = jax.random.normal(kbg, (1, 1), dtype=jnp.float32) * 0.1
    w = jax.random.normal(kw, (F, C), dtype=jnp.float32) * 0.1
    b = jax.random.normal(kb, (1, C), dtype=jnp.float32) * 0.1

    # tile_n=128 -> 2 node tiles, exercising the online cross-tile accumulation.
    # mxu_dtype=f32 so the 1e-4 check against the f32 reference holds (bf16 is the
    # recommended production default and is the function's default).
    out = global_attention(x, batch, wg, bg, w, b, G, tile_n=128, mxu_dtype=jnp.float32)
    out = jax.block_until_ready(out)

    ref = jax.block_until_ready(reference(x, batch, wg, bg, w, b, G))
    if not jnp.allclose(out, ref, atol=1e-4, rtol=1e-4):
        err = float(jnp.max(jnp.abs(out - ref)))
        raise AssertionError(f"Pallas GlobalAttention mismatch vs reference (max abs err {err})")

    print("KERNEL_OK")
</pallas_src>

<mosaic_0001>
module attributes {stable_mosaic.version = 11 : i64} {
  func.func @_global_attention_kernel(%arg0: i32, %arg1: i32, %arg2: memref<1x128xi32, #tpu.memory_space<vmem>>, %arg3: memref<128x17xf32, #tpu.memory_space<vmem>>, %arg4: memref<17x128xf32, #tpu.memory_space<vmem>>, %arg5: memref<8x128xf32, #tpu.memory_space<vmem>>, %arg6: memref<8x1xf32, #tpu.memory_space<vmem>>) attributes {dimension_semantics = [#tpu.dimension_semantics<parallel>, #tpu.dimension_semantics<arbitrary>], iteration_bounds = array<i64: 1, 2>, scalar_prefetch = 0 : i64, scratch_operands = 1 : i64, tpu.core_type = #tpu.core_type<tc>, window_params = [{transform_indices = @transform_0, window_bounds = array<i64: 1, 128>}, {transform_indices = @transform_1, window_bounds = array<i64: 128, 17>}, {pipeline_mode = #tpu.pipeline_mode<synchronous>, transform_indices = @transform_2, window_bounds = array<i64: 17, 128>}, {transform_indices = @transform_3, window_bounds = array<i64: 8, 128>}]} {
    %c0_i32 = arith.constant 0 : i32
    %0 = arith.cmpi eq, %arg1, %c0_i32 : i32
    %1 = arith.extui %0 : i1 to i32
    %c0_i32_0 = arith.constant 0 : i32
    %2 = arith.cmpi ne, %1, %c0_i32_0 : i32
    scf.if %2 {
      %cst_21 = arith.constant -1.000000e+30 : f32
      %43 = vector.broadcast %cst_21 : f32 to vector<8x1xf32>
      %c0_22 = arith.constant 0 : index
      %c0_23 = arith.constant 0 : index
      %44 = vector.load %arg6[%c0_22, %c0_23] : memref<8x1xf32, #tpu.memory_space<vmem>>, vector<8x1xf32>
      tpu.vector_store %arg6[%c0_22, %c0_23], %43 {strides = array<i32>} : memref<8x1xf32, #tpu.memory_space<vmem>>, vector<8x1xf32>,
      %cst_24 = arith.constant 0.000000e+00 : f32
      %45 = vector.broadcast %cst_24 : f32 to vector<8x128xf32>
      %c0_25 = arith.constant 0 : index
      %c0_26 = arith.constant 0 : index
      %46 = vector.load %arg5[%c0_25, %c0_26] : memref<8x128xf32, #tpu.memory_space<vmem>>, vector<8x128xf32>
      tpu.vector_store %arg5[%c0_25, %c0_26], %45 {strides = array<i32>} : memref<8x128xf32, #tpu.memory_space<vmem>>, vector<8x128xf32>,
    } else {
    }
    %c0 = arith.constant 0 : index
    %c0_1 = arith.constant 0 : index
    %3 = vector.load %arg3[%c0, %c0_1] : memref<128x17xf32, #tpu.memory_space<vmem>>, vector<128x17xf32>
    %c0_2 = arith.constant 0 : index
    %c0_3 = arith.constant 0 : index
    %4 = vector.load %arg4[%c0_2, %c0_3] : memref<17x128xf32, #tpu.memory_space<vmem>>, vector<17x128xf32>
    %cst = arith.constant dense<0.000000e+00> : vector<128x128xf32>
    %5 = tpu.matmul %3, %4, %cst {dimension_numbers = #tpu.dot_dimension_numbers<[1], [0], [0], [1], [0, 0, 1, 1], [], []>} : vector<128x17xf32>, vector<17x128xf32>, vector<128x128xf32> -> vector<128x128xf32>
    %6 = tpu.iota {dimensions = array<i32: 1>} : vector<1x128xi32>
    %c0_i32_4 = arith.constant 0 : i32
    %7 = vector.broadcast %c0_i32_4 : i32 to vector<1x128xi32>
    %8 = arith.cmpi eq, %6, %7 : vector<1x128xi32>
    %9 = arith.extui %8 : vector<1x128xi1> to vector<1x128xi32>
    %10 = arith.sitofp %9 : vector<1x128xi32> to vector<1x128xf32>
    %cst_5 = arith.constant dense<0.000000e+00> : vector<1x128xf32>
    %11 = tpu.matmul %10, %5, %cst_5 {dimension_numbers = #tpu.dot_dimension_numbers<[1], [1], [0], [0], [0, 0, 1, 0], [], []>} : vector<1x128xf32>, vector<128x128xf32>, vector<1x128xf32> -> vector<1x128xf32>
    %c0_6 = arith.constant 0 : index
    %c0_7 = arith.constant 0 : index
    %12 = vector.load %arg2[%c0_6, %c0_7] : memref<1x128xi32, #tpu.memory_space<vmem>>, vector<1x128xi32>
    %13 = tpu.iota {dimensions = array<i32: 0>} : vector<8x128xi32>
    %14 = vector.broadcast %12 : vector<1x128xi32> to vector<8x128xi32>
    %15 = arith.cmpi eq, %14, %13 : vector<8x128xi32>
    %16 = arith.extui %15 : vector<8x128xi1> to vector<8x128xi32>
    %17 = arith.sitofp %16 : vector<8x128xi32> to vector<8x128xf32>
    %c0_8 = arith.constant 0 : index
    %c0_9 = arith.constant 0 : index
    %18 = vector.load %arg6[%c0_8, %c0_9] : memref<8x1xf32, #tpu.memory_space<vmem>>, vector<8x1xf32>
    %cst_10 = arith.constant -1.000000e+30 : f32
    %19 = vector.shape_cast %11 : vector<1x128xf32> to vector<1x128xf32>
    %20 = vector.broadcast %19 : vector<1x128xf32> to vector<8x128xf32>
    %21 = vector.broadcast %cst_10 : f32 to vector<8x128xf32>
    %22 = arith.select %15, %20, %21 : vector<8x128xi1>, vector<8x128xf32>
    %cst_11 = arith.constant dense<0xFF800000> : vector<8xf32>
    %23 = vector.multi_reduction <maximumf>, %22, %cst_11 [1] : vector<8x128xf32> to vector<8xf32>
    %24 = vector.shape_cast %23 : vector<8xf32> to vector<8x1xf32>
    %25 = arith.maximumf %18, %24 : vector<8x1xf32>
    %c0_12 = arith.constant 0 : index
    %c0_13 = arith.constant 0 : index
    %26 = vector.load %arg6[%c0_12, %c0_13] : memref<8x1xf32, #tpu.memory_space<vmem>>, vector<8x1xf32>
    tpu.vector_store %arg6[%c0_12, %c0_13], %25 {strides = array<i32>} : memref<8x1xf32, #tpu.memory_space<vmem>>, vector<8x1xf32>,
    %cst_14 = arith.constant dense<0.000000e+00> : vector<1x128xf32>
    %27 = tpu.matmul %25, %17, %cst_14 {dimension_numbers = #tpu.dot_dimension_numbers<[0], [0], [1], [1], [0, 1, 1, 1], [], []>} : vector<8x1xf32>, vector<8x128xf32>, vector<1x128xf32> -> vector<1x128xf32>
    %28 = arith.subf %11, %27 : vector<1x128xf32>
    %29 = math.exp %28 : vector<1x128xf32>
    %30 = vector.broadcast %29 : vector<1x128xf32> to vector<8x128xf32>
    %31 = arith.mulf %17, %30 : vector<8x128xf32>
    %cst_15 = arith.constant dense<0.000000e+00> : vector<8x128xf32>
    %32 = tpu.matmul %31, %5, %cst_15 {dimension_numbers = #tpu.dot_dimension_numbers<[1], [0], [0], [1], [0, 0, 1, 1], [], []>} : vector<8x128xf32>, vector<128x128xf32>, vector<8x128xf32> -> vector<8x128xf32>
    %33 = arith.subf %18, %25 : vector<8x1xf32>
    %34 = math.exp %33 : vector<8x1xf32>
    %c0_16 = arith.constant 0 : index
    %c0_17 = arith.constant 0 : index
    %35 = vector.load %arg5[%c0_16, %c0_17] : memref<8x128xf32, #tpu.memory_space<vmem>>, vector<8x128xf32>
    %36 = vector.broadcast %34 : vector<8x1xf32> to vector<8x128xf32>
    %37 = arith.mulf %36, %35 : vector<8x128xf32>
    %38 = arith.addf %37, %32 : vector<8x128xf32>
    %c0_18 = arith.constant 0 : index
    %c0_19 = arith.constant 0 : index
    %39 = vector.load %arg5[%c0_18, %c0_19] : memref<8x128xf32, #tpu.memory_space<vmem>>, vector<8x128xf32>
    tpu.vector_store %arg5[%c0_18, %c0_19], %38 {strides = array<i32>} : memref<8x128xf32, #tpu.memory_space<vmem>>, vector<8x128xf32>,
    %c1_i32 = arith.constant 1 : i32
    %40 = arith.cmpi eq, %arg1, %c1_i32 : i32
    %41 = arith.extui %40 : i1 to i32
    %c0_i32_20 = arith.constant 0 : i32
    %42 = arith.cmpi ne, %41, %c0_i32_20 : i32
    scf.if %42 {
      %c0_21 = arith.constant 0 : index
      %c0_22 = arith.constant 0 : index
      %43 = vector.load %arg5[%c0_21, %c0_22] : memref<8x128xf32, #tpu.memory_space<vmem>>, vector<8x128xf32>
      %44 = tpu.iota {dimensions = array<i32: 0>} : vector<128x1xi32>
      %c1_i32_23 = arith.constant 1 : i32
      %45 = vector.broadcast %c1_i32_23 : i32 to vector<128x1xi32>
      %46 = arith.cmpi eq, %44, %45 : vector<128x1xi32>
      %47 = arith.extui %46 : vector<128x1xi1> to vector<128x1xi32>
      %48 = arith.sitofp %47 : vector<128x1xi32> to vector<128x1xf32>
      %cst_24 = arith.constant dense<0.000000e+00> : vector<8x1xf32>
      %49 = tpu.matmul %43, %48, %cst_24 {dimension_numbers = #tpu.dot_dimension_numbers<[1], [0], [0], [1], [0, 0, 1, 1], [], []>} : vector<8x128xf32>, vector<128x1xf32>, vector<8x1xf32> -> vector<8x1xf32>
      %cst_25 = arith.constant 1.000000e-16 : f32
      %50 = vector.broadcast %cst_25 : f32 to vector<8x1xf32>
      %51 = arith.addf %49, %50 : vector<8x1xf32>
      %52 = tpu.reciprocal %51 : vector<8x1xf32> -> vector<8x1xf32>
      %53 = vector.broadcast %52 : vector<8x1xf32> to vector<8x128xf32>
      %54 = arith.mulf %43, %53 : vector<8x128xf32>
      %c0_26 = arith.constant 0 : index
      %c0_27 = arith.constant 0 : index
      %55 = vector.load %arg5[%c0_26, %c0_27] : memref<8x128xf32, #tpu.memory_space<vmem>>, vector<8x128xf32>
      tpu.vector_store %arg5[%c0_26, %c0_27], %54 {strides = array<i32>} : memref<8x128xf32, #tpu.memory_space<vmem>>, vector<8x128xf32>,
    } else {
    }
    return
  }
  func.func @transform_0(%arg0: i32, %arg1: i32) -> (i32, i32) {
    %c0_i32 = arith.constant 0 : i32
    %c0_i32_0 = arith.constant 0 : i32
    return %c0_i32, %arg1 : i32, i32
  }
  func.func @transform_1(%arg0: i32, %arg1: i32) -> (i32, i32) {
    %c0_i32 = arith.constant 0 : i32
    %c0_i32_0 = arith.constant 0 : i32
    return %arg1, %c0_i32 : i32, i32
  }
  func.func @transform_2(%arg0: i32, %arg1: i32) -> (i32, i32) {
    %c0_i32 = arith.constant 0 : i32
    %c0_i32_0 = arith.constant 0 : i32
    return %c0_i32, %arg0 : i32, i32
  }
  func.func @transform_3(%arg0: i32, %arg1: i32) -> (i32, i32) {
    %c0_i32 = arith.constant 0 : i32
    %c0_i32_0 = arith.constant 0 : i32
    return %c0_i32, %arg0 : i32, i32
  }
}

</mosaic_0001>

<llo_original>
// kernel: tpu_custom_call.1
$region0: #{tpu_custom_call.1}
  #allocation0 [shape = 'u32[]', space=smem, size = 0x4, offset = 0x4, fixed_abs, tag = 'smem constant byte address 0x4 - core index']
  #allocation1 [shape = 'u32[144,128]{1,0:T(1,128)}', space=vmem, size = 0x12000, scoped, tag = 'internal scratch']
  #allocation2 [shape = 'f32[8,1]{1,0:T(8,128)}', space=vmem, size = 0x1000, scoped, tag = 'scratch operand']
  %s0 = inlined_call_operand.vmem [shape: s32[1,256], index: 0, kind: input, shape index: {}]
  %s1 = inlined_call_operand.vmem [shape: f32[256,17], index: 1, kind: input, shape index: {}]
  %s2 = inlined_call_operand.vmem [shape: f32[17,128], index: 2, kind: input, shape index: {}]
  %s3 = inlined_call_operand.hbm [shape: f32[8,128], index: 3, kind: output, shape index: {}]
  %s4 = sld [smem:[#allocation0]]
  $region53: #{tpu_custom_call.1} parent=0
    _
  %s6 = ssub.s32 1, %s4
  %s7 = scalar_select 0, %s6, %s4
  $region1: #{tpu_custom_call.1} parent=0
    #allocation3 [shape = 'u8[4096]{0}', space=vmem, size = 0x1000, scoped, tag = 'output window, operand 0, single buffered']
    #allocation4 [shape = 's32[2]{0}', space=sflag, size = 0x8, scoped, tag = 'scoped memory for tpu_custom_call.1']
    %8 = vsyncpa [#allocation4], 0
    loop: start=0, step=1, limit=4
    $region2: #{tpu_custom_call.1} parent=1 // loop_pre_header
      _
    $region3: #{tpu_custom_call.1} parent=1 // loop_header
      %s10 = sphi 0, %s14
      %p11 = scmp.ge.s32.totalorder %s10, 4
      %s17 = sphi 0, %s29
      %s18 = sphi 0, %s25
      %s19 = sphi 0, %s17
      %s20 = sphi 0, %s18
      %s21 = sphi 0, %s19
      %s22 = sphi 0, %s20
      %s32 = sphi 0, %s34
      %s35 = sphi 0, %s32
      %s36 = sphi 0, %s35
      %s52 = sphi 0, %s36
      %s58 = sphi 0, %s60
      %s61 = sphi 0, %s58
      %s62 = sphi 0, %s61
      %s78 = sphi 0, %s62
      %s84 = sphi 0, %s86
      %s87 = sphi 0, %s84
      %s88 = sphi 0, %s87
      %s104 = sphi 0, %s88
      %s110 = sphi 0, %s112
      %s113 = sphi 0, %s110
      %s114 = sphi 0, %s113
      %s130 = sphi 0, %s114
    $region4: #{tpu_custom_call.1} parent=1 // loop_header_branch
      %13 = sbr.rel (%p11) target = $region8
    $region5: #{tpu_custom_call.1} parent=1 // loop_body
      %s15 = ssub.s32 %s10, 1
      %s16 = ssub.s32 %s10, 2
      %s23 = sadd.s32 1, %s18
      %p24 = scmp.ge.s32.totalorder %s23, 2
      %s25 = scalar_select %p24, 0, %s23
      %s26 = sadd.s32 1, %s17
      %s27 = scalar_select %p24, %s26, %s17
      %p28 = scmp.ge.s32.totalorder %s27, 1
      %s29 = scalar_select %p28, 0, %s27
      %s30 = ssub.s32 %s18, %s25
      %p31 = scmp.eq.s32.totalorder %s30, 0
      %s33 = sadd.s32 %s32, 1
      %s34 = scalar_select %p31, %s32, %s33
      %p37 = pneg %p31
      %p38 = scmp.eq.s32.totalorder %s10, 1
      %p39 = por %p37, %p38
      %p40 = scmp.ne.s32.totalorder %s32, %s35
      %p41 = scmp.eq.s32.totalorder %s10, 0
      %p42 = por %p40, %p41
      %p43 = scmp.ne.s32.totalorder %s32, %s35
      %p44 = scmp.eq.s32.totalorder %s15, 1
      %p45 = por %p43, %p44
      %p46 = scmp.ne.s32.totalorder %s35, %s36
      %p47 = scmp.eq.s32.totalorder %s15, 0
      %p48 = por %p46, %p47
      %p49 = scmp.ne.s32.totalorder %s35, %s36
      %p50 = scmp.eq.s32.totalorder %s16, 1
      %p51 = por %p49, %p50
      %p53 = scmp.ne.s32.totalorder %s36, %s52
      %p54 = scmp.eq.s32.totalorder %s16, 0
      %p55 = por %p53, %p54
      %s56 = ssub.s32 %s18, %s25
      %p57 = scmp.eq.s32.totalorder %s56, 0
      %s59 = sadd.s32 %s58, 1
      %s60 = scalar_select %p57, %s58, %s59
      %p63 = pneg %p57
      %p64 = scmp.eq.s32.totalorder %s10, 1
      %p65 = por %p63, %p64
      %p66 = scmp.ne.s32.totalorder %s58, %s61
      %p67 = scmp.eq.s32.totalorder %s10, 0
      %p68 = por %p66, %p67
      %p69 = scmp.ne.s32.totalorder %s58, %s61
      %p70 = scmp.eq.s32.totalorder %s15, 1
      %p71 = por %p69, %p70
      %p72 = scmp.ne.s32.totalorder %s61, %s62
      %p73 = scmp.eq.s32.totalorder %s15, 0
      %p74 = por %p72, %p73
      %p75 = scmp.ne.s32.totalorder %s61, %s62
      %p76 = scmp.eq.s32.totalorder %s16, 1
      %p77 = por %p75, %p76
      %p79 = scmp.ne.s32.totalorder %s62, %s78
      %p80 = scmp.eq.s32.totalorder %s16, 0
      %p81 = por %p79, %p80
      %s82 = ssub.s32 %s17, %s29
      %p83 = scmp.eq.s32.totalorder %s82, 0
      %s85 = sadd.s32 %s84, 1
      %s86 = scalar_select %p83, %s84, %s85
      %p89 = pneg %p83
      %p90 = scmp.eq.s32.totalorder %s10, 1
      %p91 = por %p89, %p90
      %p92 = scmp.ne.s32.totalorder %s84, %s87
      %p93 = scmp.eq.s32.totalorder %s10, 0
      %p94 = por %p92, %p93
      %p95 = scmp.ne.s32.totalorder %s84, %s87
      %p96 = scmp.eq.s32.totalorder %s15, 1
      %p97 = por %p95, %p96
      %p98 = scmp.ne.s32.totalorder %s87, %s88
      %p99 = scmp.eq.s32.totalorder %s15, 0
      %p100 = por %p98, %p99
      %p101 = scmp.ne.s32.totalorder %s87, %s88
      %p102 = scmp.eq.s32.totalorder %s16, 1
      %p103 = por %p101, %p102
      %p105 = scmp.ne.s32.totalorder %s88, %s104
      %p106 = scmp.eq.s32.totalorder %s16, 0
      %p107 = por %p105, %p106
      %s108 = ssub.s32 %s17, %s29
      %p109 = scmp.eq.s32.totalorder %s108, 0
      %s111 = sadd.s32 %s110, 1
      %s112 = scalar_select %p109, %s110, %s111
      %p115 = pneg %p109
      %p116 = scmp.eq.s32.totalorder %s10, 1
      %p117 = por %p115, %p116
      %p118 = scmp.ne.s32.totalorder %s110, %s113
      %p119 = scmp.eq.s32.totalorder %s10, 0
      %p120 = por %p118, %p119
      %p121 = scmp.ne.s32.totalorder %s110, %s113
      %p122 = scmp.eq.s32.totalorder %s15, 1
      %p123 = por %p121, %p122
      %p124 = scmp.ne.s32.totalorder %s113, %s114
      %p125 = scmp.eq.s32.totalorder %s15, 0
      %p126 = por %p124, %p125
      %p127 = scmp.ne.s32.totalorder %s113, %s114
      %p128 = scmp.eq.s32.totalorder %s16, 1
      %p129 = por %p127, %p128
      %p131 = scmp.ne.s32.totalorder %s114, %s130
      %p132 = scmp.eq.s32.totalorder %s16, 0
      %p133 = por %p131, %p132
      %p134 = scmp.le.s32.totalorder 1, %s10
      %p135 = scmp.lt.s32.totalorder %s10, 3
      %p136 = pnand %p134, %p135
      %p137 = pneg %p136
      // Predicated region
      $region9: #{tpu_custom_call.1} parent=5 // pred_check
        _
      $region10: #{tpu_custom_call.1} parent=5 // pred_check_branch
        %139 = sbr.rel (%p136) target = $region12
      $region11: #{tpu_custom_call.1} parent=5 // pred_region
        %s140 = ssub.s32 %s10, 1
        // Predicated region
        $region13: #{tpu_custom_call.1} parent=11 // pred_check
          %p141 = pneg %p100
        $region14: #{tpu_custom_call.1} parent=11 // pred_check_branch
          %143 = sbr.rel (%p141) target = $region16
        $region15: #{tpu_custom_call.1} parent=11 // pred_region
          %p144 = scmp.lt.s32.totalorder %s19, 0
          %s145 = scalar_select %p144, %s19, 0
          %s146 = smul.addr %s145, 8
          %s147 = scalar_lea.vmem %s2, %s146
        $region16: #{tpu_custom_call.1} parent=11 // pred_fallthru
          _
      $region12: #{tpu_custom_call.1} parent=5 // pred_fallthru
        _
      %p148 = scmp.lt.s32.totalorder %s10, 2
      // Predicated region
      $region17: #{tpu_custom_call.1} parent=5 // pred_check
        %p149 = pneg %p148
      $region18: #{tpu_custom_call.1} parent=5 // pred_check_branch
        %151 = sbr.rel (%p149) target = $region20
      $region19: #{tpu_custom_call.1} parent=5 // pred_region
        // Predicated region
        $region21: #{tpu_custom_call.1} parent=19 // pred_check
          %p152 = pneg %p42
        $region22: #{tpu_custom_call.1} parent=19 // pred_check_branch
          %154 = sbr.rel (%p152) target = $region24
        $region23: #{tpu_custom_call.1} parent=19 // pred_region
          %p155 = scmp.lt.s32.totalorder %s18, 1
          %s156 = scalar_select %p155, %s18, 1
          %s157 = scalar_lea.vmem %s0, %s156
        $region24: #{tpu_custom_call.1} parent=19 // pred_fallthru
          _
        // Predicated region
        $region25: #{tpu_custom_call.1} parent=19 // pred_check
          %p158 = pneg %p68
        $region26: #{tpu_custom_call.1} parent=19 // pred_check_branch
          %160 = sbr.rel (%p158) target = $region28
        $region27: #{tpu_custom_call.1} parent=19 // pred_region
          %s161 = smul.u32 16, %s18
          %p162 = scmp.lt.s32.totalorder %s161, 31
          %s163 = scalar_select %p162, %s161, 31
          %s164 = smul.addr %s163, 8
          %s165 = scalar_lea.vmem %s1, %s164
          %s166 = smul.u32 16, %s18
        $region28: #{tpu_custom_call.1} parent=19 // pred_fallthru
          _
      $region20: #{tpu_custom_call.1} parent=5 // pred_fallthru
        _
      %p167 = scmp.le.s32.totalorder 1, %s10
      %p168 = scmp.lt.s32.totalorder %s10, 3
      %p169 = pnand %p167, %p168
      %p170 = pneg %p169
      // Predicated region
      $region29: #{tpu_custom_call.1} parent=5 // pred_check
        _
      $region30: #{tpu_custom_call.1} parent=5 // pred_check_branch
        %172 = sbr.rel (%p169) target = $region32
      $region31: #{tpu_custom_call.1} parent=5 // pred_region
        %s173 = ssub.s32 %s10, 1
        %p174 = scmp.lt.s32.totalorder %s20, 1
        %s175 = scalar_select %p174, %s20, 1
        %s176 = scalar_lea.vmem %s0, %s175
        %p177 = pneg %p48
        %p178 = pneg %p45
        %s179 = smul.u32 16, %s20
        %p180 = scmp.lt.s32.totalorder %s179, 31
        %s181 = scalar_select %p180, %s179, 31
        %s182 = smul.addr %s181, 8
        %s183 = scalar_lea.vmem %s1, %s182
        %p184 = pneg %p74
        %p185 = pneg %p71
        %p186 = scmp.lt.s32.totalorder %s19, 0
        %s187 = scalar_select %p186, %s19, 0
        %s188 = smul.addr %s187, 8
        %s189 = scalar_lea.vmem %s2, %s188
        %p190 = pneg %p100
        %p191 = pneg %p97
        %p192 = pneg %p126
        %p193 = pneg %p123
        %p194 = scmp.lt.s32.totalorder %s20, 1
        %s195 = scalar_select %p194, %s20, 1
        %s196 = scalar_lea.vmem %s0, %s195
        %s197 = smul.u32 16, %s20
        %p198 = scmp.lt.s32.totalorder %s197, 31
        %s199 = scalar_select %p198, %s197, 31
        %s200 = smul.addr %s199, 8
        %s201 = scalar_lea.vmem %s1, %s200
        %s202 = smul.u32 16, %s20
        %p203 = scmp.lt.s32.totalorder %s19, 0
        %s204 = scalar_select %p203, %s19, 0
        %s205 = smul.addr %s204, 8
        %s206 = scalar_lea.vmem %s2, %s205
        %p207 = scmp.eq.s32.totalorder %s20, 0
        // Predicated region
        $region33: #{tpu_custom_call.1} parent=31 // pred_check
          %p208 = pneg %p207
        $region34: #{tpu_custom_call.1} parent=31 // pred_check_branch
          %210 = sbr.rel (%p208) target = $region36
        $region35: #{tpu_custom_call.1} parent=31 // pred_region
          %vm211 = vcmask 7168
          %212 = vst.msk [vmem:[#allocation2] sm:$0xff] %vm211, -1e+30
          %213 = vst [vmem:[#allocation3] sm:$0xff] 0.0
        $region36: #{tpu_custom_call.1} parent=31 // pred_fallthru
          _
        %v214 = vld [vmem:[%s201] sm:$0xff]
        %v215 = vld [vmem:[%s201 + $0x8] sm:$0xff]
        %v216 = vld [vmem:[%s201 + $0x10] sm:$0xff]
        %v217 = vld [vmem:[%s201 + $0x18] sm:$0xff]
        %v218 = vld [vmem:[%s201 + $0x20] sm:$0xff]
        %v219 = vld [vmem:[%s201 + $0x28] sm:$0xff]
        %v220 = vld [vmem:[%s201 + $0x30] sm:$0xff]
        %v221 = vld [vmem:[%s201 + $0x38] sm:$0xff]
        %v222 = vld [vmem:[%s201 + $0x40] sm:$0xff]
        %v223 = vld [vmem:[%s201 + $0x48] sm:$0xff]
        %v224 = vld [vmem:[%s201 + $0x50] sm:$0xff]
        %v225 = vld [vmem:[%s201 + $0x58] sm:$0xff]
        %v226 = vld [vmem:[%s201 + $0x60] sm:$0xff]
        %v227 = vld [vmem:[%s201 + $0x68] sm:$0xff]
        %v228 = vld [vmem:[%s201 + $0x70] sm:$0xff]
        %v229 = vld [vmem:[%s201 + $0x78] sm:$0xff]
        %v230 = vld [vmem:[%s206] sm:$0xff]
        %v231 = vld [vmem:[%s206 + $0x8] sm:$0xff]
        %v232 = vld [vmem:[%s206 + $0x10] sm:$0x1]
        %vm233 = vcmask 138240
        %v235 = vsel %vm233, %v214, 0
        %v238 = vsel %vm233, %v215, 0
        %v241 = vsel %vm233, %v216, 0
        %v244 = vsel %vm233, %v217, 0
        %v247 = vsel %vm233, %v218, 0
        %v250 = vsel %vm233, %v219, 0
        %v253 = vsel %vm233, %v220, 0
        %v256 = vsel %vm233, %v221, 0
        %v259 = vsel %vm233, %v222, 0
        %v262 = vsel %vm233, %v223, 0
        %v265 = vsel %vm233, %v224, 0
        %v268 = vsel %vm233, %v225, 0
        %v271 = vsel %vm233, %v226, 0
        %v274 = vsel %vm233, %v227, 0
        %v277 = vsel %vm233, %v228, 0
        %v280 = vsel %vm233, %v229, 0
        %vm282 = vcmask 1040384
        %v284 = vsel %vm282, %v232, 0
        %286 = vmatprep.subr.mxu0 0.0
        %287 = vmatpush1.msra.mxu0 %v230
        %288 = vmatprep.subr.mxu0 0.0
        %289 = vmatpush1.msra.mxu0 %v231
        %290 = vmatprep.subr.mxu0 0.0
        %291 = vmatpush1.msra.mxu0 %v284
        %292 = vmatprep.subr.mxu0 0.0
        %293 = vmatpush1.msra.mxu0 0.0
        %294 = vmatprep.subr.mxu0 0.0
        %295 = vmatpush1.msra.mxu0 0.0
        %296 = vmatprep.subr.mxu0 0.0
        %297 = vmatpush1.msra.mxu0 0.0
        %298 = vmatprep.subr.mxu0 0.0
        %299 = vmatpush1.msra.mxu0 0.0
        %300 = vmatprep.subr.mxu0 0.0
        %301 = vmatpush1.msra.mxu0 0.0
        %302 = vmatprep.subr.mxu0 0.0
        %303 = vmatpush1.msra.mxu0 0.0
        %304 = vmatprep.subr.mxu0 0.0
        %305 = vmatpush1.msra.mxu0 0.0
        %306 = vmatprep.subr.mxu0 0.0
        %307 = vmatpush1.msra.mxu0 0.0
        %308 = vmatprep.subr.mxu0 0.0
        %309 = vmatpush1.msra.mxu0 0.0
        %310 = vmatprep.subr.mxu0 0.0
        %311 = vmatpush1.msra.mxu0 0.0
        %312 = vmatprep.subr.mxu0 0.0
        %313 = vmatpush1.msra.mxu0 0.0
        %314 = vmatprep.subr.mxu0 0.0
        %315 = vmatpush1.msra.mxu0 0.0
        %316 = vmatprep.subr.mxu0 0.0
        %317 = vmatpush1.msra.mxu0 0.0
        %318 = vmatprep.subr.mxu0 0.0
        %319 = vmatpush1.msra.mxu0 0.0
        %320 = vmatprep.subr.mxu0 0.0
        %321 = vmatpush1.msra.mxu0 0.0
        %322 = vmatprep.subr.mxu0 0.0
        %323 = vmatpush1.msra.mxu0 0.0
        %324 = vmatprep.subr.mxu0 0.0
        %325 = vmatpush1.msra.mxu0 0.0
        %326 = vmatprep.subr.mxu0 0.0
        %327 = vmatpush1.msra.mxu0 0.0
        %328 = vmatprep.subr.mxu0 0.0
        %329 = vmatpush1.msra.mxu0 0.0
        %330 = vmatprep.subr.mxu0 0.0
        %331 = vmatpush1.msra.mxu0 0.0
        %332 = vmatprep.subr.mxu0 0.0
        %333 = vmatpush1.msra.mxu0 0.0
        %334 = vmatprep.subr.mxu0 0.0
        %335 = vmatpush1.msra.mxu0 0.0
        %336 = vmatprep.subr.mxu0 0.0
        %337 = vmatpush1.msra.mxu0 0.0
        %338 = vmatprep.subr.mxu0 0.0
        %339 = vmatpush1.msra.mxu0 0.0
        %340 = vmatprep.subr.mxu0 0.0
        %341 = vmatpush1.msra.mxu0 0.0
        %342 = vmatprep.subr.mxu0 0.0
        %343 = vmatpush1.msra.mxu0 0.0
        %344 = vmatprep.subr.mxu0 0.0
        %345 = vmatpush1.msra.mxu0 0.0
        %346 = vmatprep.subr.mxu0 0.0
        %347 = vmatpush1.msra.mxu0 0.0
        %348 = vmatprep.subr.mxu0 0.0
        %349 = vmatpush1.msra.mxu0 0.0
        %350 = vmatprep.mubr.f32.mxu0 0.0
        %351 = vmatmul.mubr.f32.gmra.mrb[0].mxu0 %v235
        %v352 = vpop.f32.mrb[0].mxu0
        %v353 = vadd.f32 0.0, %v352
        %v354 = vpop.f32.mrb[0].mxu0
        %355 = vmatprep.mubr.f32.mxu0 0.0
        %356 = vmatmul.mubr.f32.gmra.mrb[0].mxu0 %v238
        %v357 = vpop.f32.mrb[0].mxu0
        %v358 = vadd.f32 0.0, %v357
        %v359 = vpop.f32.mrb[0].mxu0
        %360 = vmatprep.mubr.f32.mxu0 0.0
        %361 = vmatmul.mubr.f32.gmra.mrb[0].mxu0 %v241
        %v362 = vpop.f32.mrb[0].mxu0
        %v363 = vadd.f32 0.0, %v362
        %v364 = vpop.f32.mrb[0].mxu0
        %365 = vmatprep.mubr.f32.mxu0 0.0
        %366 = vmatmul.mubr.f32.gmra.mrb[0].mxu0 %v244
        %v367 = vpop.f32.mrb[0].mxu0
        %v368 = vadd.f32 0.0, %v367
        %v369 = vpop.f32.mrb[0].mxu0
        %370 = vmatprep.mubr.f32.mxu0 0.0
        %371 = vmatmul.mubr.f32.gmra.mrb[0].mxu0 %v247
        %v372 = vpop.f32.mrb[0].mxu0
        %v373 = vadd.f32 0.0, %v372
        %v374 = vpop.f32.mrb[0].mxu0
        %375 = vmatprep.mubr.f32.mxu0 0.0
        %376 = vmatmul.mubr.f32.gmra.mrb[0].mxu0 %v250
        %v377 = vpop.f32.mrb[0].mxu0
        %v378 = vadd.f32 0.0, %v377
        %v379 = vpop.f32.mrb[0].mxu0
        %380 = vmatprep.mubr.f32.mxu0 0.0
        %381 = vmatmul.mubr.f32.gmra.mrb[0].mxu0 %v253
        %v382 = vpop.f32.mrb[0].mxu0
        %v383 = vadd.f32 0.0, %v382
        %v384 = vpop.f32.mrb[0].mxu0
        %385 = vmatprep.mubr.f32.mxu0 0.0
        %386 = vmatmul.mubr.f32.gmra.mrb[0].mxu0 %v256
        %v387 = vpop.f32.mrb[0].mxu0
        %v388 = vadd.f32 0.0, %v387
        %v389 = vpop.f32.mrb[0].mxu0
        %390 = vmatprep.mubr.f32.mxu0 0.0
        %391 = vmatmul.mubr.f32.gmra.mrb[0].mxu0 %v259
        %v392 = vpop.f32.mrb[0].mxu0
        %v393 = vadd.f32 0.0, %v392
        %v394 = vpop.f32.mrb[0].mxu0
        %395 = vmatprep.mubr.f32.mxu0 0.0
        %396 = vmatmul.mubr.f32.gmra.mrb[0].mxu0 %v262
        %v397 = vpop.f32.mrb[0].mxu0
        %v398 = vadd.f32 0.0, %v397
        %v399 = vpop.f32.mrb[0].mxu0
        %400 = vmatprep.mubr.f32.mxu0 0.0
        %401 = vmatmul.mubr.f32.gmra.mrb[0].mxu0 %v265
        %v402 = vpop.f32.mrb[0].mxu0
        %v403 = vadd.f32 0.0, %v402
        %v404 = vpop.f32.mrb[0].mxu0
        %405 = vmatprep.mubr.f32.mxu0 0.0
        %406 = vmatmul.mubr.f32.gmra.mrb[0].mxu0 %v268
        %v407 = vpop.f32.mrb[0].mxu0
        %v408 = vadd.f32 0.0, %v407
        %v409 = vpop.f32.mrb[0].mxu0
        %410 = vmatprep.mubr.f32.mxu0 0.0
        %411 = vmatmul.mubr.f32.gmra.mrb[0].mxu0 %v271
        %v412 = vpop.f32.mrb[0].mxu0
        %v413 = vadd.f32 0.0, %v412
        %v414 = vpop.f32.mrb[0].mxu0
        %415 = vmatprep.mubr.f32.mxu0 0.0
        %416 = vmatmul.mubr.f32.gmra.mrb[0].mxu0 %v274
        %v417 = vpop.f32.mrb[0].mxu0
        %v418 = vadd.f32 0.0, %v417
        %v419 = vpop.f32.mrb[0].mxu0
        %420 = vmatprep.mubr.f32.mxu0 0.0
        %421 = vmatmul.mubr.f32.gmra.mrb[0].mxu0 %v277
        %v422 = vpop.f32.mrb[0].mxu0
        %v423 = vadd.f32 0.0, %v422
        %v424 = vpop.f32.mrb[0].mxu0
        %425 = vmatprep.mubr.f32.mxu0 0.0
        %426 = vmatmul.mubr.f32.gmra.mrb[0].mxu0 %v280
        %v427 = vpop.f32.mrb[0].mxu0
        %v428 = vadd.f32 0.0, %v427
        %v429 = vpop.f32.mrb[0].mxu0
        %430 = vdwg.mxu0
        %v431 = vlaneseq
        %v432 = vand.u32 %v431, 127
        %vm433 = vcmp.eq.s32.totalorder %v432, 0
        %v434 = vsel %vm433, 1, 0
        %v435 = vcvt.s32.f32 %v434
        %436 = vmatprep.subr.mxu0 0.0
        %437 = vmatpush1.xpose.msra.mxu0 %v353
        %438 = vmatprep.subr.mxu0 0.0
        %439 = vmatpush1.xpose.msra.mxu0 %v358
        %440 = vmatprep.subr.mxu0 0.0
        %441 = vmatpush1.xpose.msra.mxu0 %v363
        %442 = vmatprep.subr.mxu0 0.0
        %443 = vmatpush1.xpose.msra.mxu0 %v368
        %444 = vmatprep.subr.mxu0 0.0
        %445 = vmatpush1.xpose.msra.mxu0 %v373
        %446 = vmatprep.subr.mxu0 0.0
        %447 = vmatpush1.xpose.msra.mxu0 %v378
        %448 = vmatprep.subr.mxu0 0.0
        %449 = vmatpush1.xpose.msra.mxu0 %v383
        %450 = vmatprep.subr.mxu0 0.0
        %451 = vmatpush1.xpose.msra.mxu0 %v388
        %452 = vmatprep.subr.mxu0 0.0
        %453 = vmatpush1.xpose.msra.mxu0 %v393
        %454 = vmatprep.subr.mxu0 0.0
        %455 = vmatpush1.xpose.msra.mxu0 %v398
        %456 = vmatprep.subr.mxu0 0.0
        %457 = vmatpush1.xpose.msra.mxu0 %v403
        %458 = vmatprep.subr.mxu0 0.0
        %459 = vmatpush1.xpose.msra.mxu0 %v408
        %460 = vmatprep.subr.mxu0 0.0
        %461 = vmatpush1.xpose.msra.mxu0 %v413
        %462 = vmatprep.subr.mxu0 0.0
        %463 = vmatpush1.xpose.msra.mxu0 %v418
        %464 = vmatprep.subr.mxu0 0.0
        %465 = vmatpush1.xpose.msra.mxu0 %v423
        %466 = vmatprep.subr.mxu0 0.0
        %467 = vmatpush1.xpose.msra.mxu0 %v428
        %468 = vmatprep.subr.mxu0 0.0
        %469 = vmatpush1.xpose.msra.mxu0 0.0
        %470 = vmatprep.subr.mxu0 0.0
        %471 = vmatpush1.xpose.msra.mxu0 0.0
        %472 = vmatprep.subr.mxu0 0.0
        %473 = vmatpush1.xpose.msra.mxu0 0.0
        %474 = vmatprep.subr.mxu0 0.0
        %475 = vmatpush1.xpose.msra.mxu0 0.0
        %476 = vmatprep.subr.mxu0 0.0
        %477 = vmatpush1.xpose.msra.mxu0 0.0
        %478 = vmatprep.subr.mxu0 0.0
        %479 = vmatpush1.xpose.msra.mxu0 0.0
        %480 = vmatprep.subr.mxu0 0.0
        %481 = vmatpush1.xpose.msra.mxu0 0.0
        %482 = vmatprep.subr.mxu0 0.0
        %483 = vmatpush1.xpose.msra.mxu0 0.0
        %484 = vmatprep.subr.mxu0 0.0
        %485 = vmatpush1.xpose.msra.mxu0 0.0
        %486 = vmatprep.subr.mxu0 0.0
        %487 = vmatpush1.xpose.msra.mxu0 0.0
        %488 = vmatprep.subr.mxu0 0.0
        %489 = vmatpush1.xpose.msra.mxu0 0.0
        %490 = vmatprep.subr.mxu0 0.0
        %491 = vmatpush1.xpose.msra.mxu0 0.0
        %492 = vmatprep.subr.mxu0 0.0
        %493 = vmatpush1.xpose.msra.mxu0 0.0
        %494 = vmatprep.subr.mxu0 0.0
        %495 = vmatpush1.xpose.msra.mxu0 0.0
        %496 = vmatprep.subr.mxu0 0.0
        %497 = vmatpush1.xpose.msra.mxu0 0.0
        %498 = vmatprep.subr.mxu0 0.0
        %499 = vmatpush1.xpose.msra.mxu0 0.0
        %500 = vmatprep.mubr.f32.mxu0 0.0
        %501 = vmatmul.mubr.f32.gmra.mrb[0].mxu0 %v435
        %v502 = vpop.f32.mrb[0].mxu0
        %v503 = vadd.f32 0.0, %v502
        %v504 = vpop.f32.mrb[0].mxu0
        %505 = vdwg.mxu0
        %v506 = vld [vmem:[%s196] sm:$0x1]
        %v507 = vlaneseq
        %v508 = vshrl.u32 %v507, 7
        %v509 = vlaneseq
        %v510 = vshrl.u32 %v509, 7
        %v511 = vsub.s32 0, %v510
        %v512 = vrot.slane %v506, %v511
        %vm513 = vcmp.eq.s32.totalorder %v512, %v508
        %v514 = vsel %vm513, 1, 0
        %v515 = vcvt.s32.f32 %v514
        %v516 = vld [vmem:[#allocation2] sm:$0xff]
        %v517 = vlaneseq
        %v518 = vshrl.u32 %v517, 7
        %v519 = vsub.s32 0, %v518
        %v520 = vrot.slane %v503, %v519
        %v521 = vsel %vm513, %v520, -1e+30
        %522 = vmax.xlane.f32.xlu0 %v521
        %v523 = vpop.xlane.xlu0 %522
        %v524 = vmax.f32 %v516, %v523
        %vm525 = vcmask 7168
        %526 = vst.msk [vmem:[#allocation2] sm:$0xff] %vm525, %v524
        %527 = vxpose.xlu0.b32.start [1/16] %v524, 128
        %528 = vxpose.xlu0.b32.cont [2/16] 0.0, 128
        %529 = vxpose.xlu0.b32.cont [3/16] 0.0, 128
        %530 = vxpose.xlu0.b32.cont [4/16] 0.0, 128
        %531 = vxpose.xlu0.b32.cont [5/16] 0.0, 128
        %532 = vxpose.xlu0.b32.cont [6/16] 0.0, 128
        %533 = vxpose.xlu0.b32.cont [7/16] 0.0, 128
        %534 = vxpose.xlu0.b32.cont [8/16] 0.0, 128
        %535 = vxpose.xlu0.b32.cont [9/16] 0.0, 128
        %536 = vxpose.xlu0.b32.cont [10/16] 0.0, 128
        %537 = vxpose.xlu0.b32.cont [11/16] 0.0, 128
        %538 = vxpose.xlu0.b32.cont [12/16] 0.0, 128
        %539 = vxpose.xlu0.b32.cont [13/16] 0.0, 128
        %540 = vxpose.xlu0.b32.cont [14/16] 0.0, 128
        %541 = vxpose.xlu0.b32.cont [15/16] 0.0, 128
        %542 = vxpose.xlu0.b32.end [16/16] 0.0, 128
        %v543 = vpop.trf.xlu0
        %v544 = vpop.trf.xlu0
        %v545 = vpop.trf.xlu0
        %v546 = vpop.trf.xlu0
        %v547 = vpop.trf.xlu0
        %v548 = vpop.trf.xlu0
        %v549 = vpop.trf.xlu0
        %v550 = vpop.trf.xlu0
        %v551 = vpop.trf.xlu0
        %v552 = vpop.trf.xlu0
        %v553 = vpop.trf.xlu0
        %v554 = vpop.trf.xlu0
        %v555 = vpop.trf.xlu0
        %v556 = vpop.trf.xlu0
        %v557 = vpop.trf.xlu0
        %v558 = vpop.trf.xlu0
        %vm559 = vcmask 64512
        %v561 = vsel %vm559, %v543, 0
        %563 = vmatprep.subr.mxu0 0.0
        %564 = vmatpush1.msra.mxu0 %v515
        %565 = vmatprep.subr.mxu0 0.0
        %566 = vmatpush1.msra.mxu0 0.0
        %567 = vmatprep.subr.mxu0 0.0
        %568 = vmatpush1.msra.mxu0 0.0
        %569 = vmatprep.subr.mxu0 0.0
        %570 = vmatpush1.msra.mxu0 0.0
        %571 = vmatprep.subr.mxu0 0.0
        %572 = vmatpush1.msra.mxu0 0.0
        %573 = vmatprep.subr.mxu0 0.0
        %574 = vmatpush1.msra.mxu0 0.0
        %575 = vmatprep.subr.mxu0 0.0
        %576 = vmatpush1.msra.mxu0 0.0
        %577 = vmatprep.subr.mxu0 0.0
        %578 = vmatpush1.msra.mxu0 0.0
        %579 = vmatprep.subr.mxu0 0.0
        %580 = vmatpush1.msra.mxu0 0.0
        %581 = vmatprep.subr.mxu0 0.0
        %582 = vmatpush1.msra.mxu0 0.0
        %583 = vmatprep.subr.mxu0 0.0
        %584 = vmatpush1.msra.mxu0 0.0
        %585 = vmatprep.subr.mxu0 0.0
        %586 = vmatpush1.msra.mxu0 0.0
        %587 = vmatprep.subr.mxu0 0.0
        %588 = vmatpush1.msra.mxu0 0.0
        %589 = vmatprep.subr.mxu0 0.0
        %590 = vmatpush1.msra.mxu0 0.0
        %591 = vmatprep.subr.mxu0 0.0
        %592 = vmatpush1.msra.mxu0 0.0
        %593 = vmatprep.subr.mxu0 0.0
        %594 = vmatpush1.msra.mxu0 0.0
        %595 = vmatprep.subr.mxu0 0.0
        %596 = vmatpush1.msra.mxu0 0.0
        %597 = vmatprep.subr.mxu0 0.0
        %598 = vmatpush1.msra.mxu0 0.0
        %599 = vmatprep.subr.mxu0 0.0
        %600 = vmatpush1.msra.mxu0 0.0
        %601 = vmatprep.subr.mxu0 0.0
        %602 = vmatpush1.msra.mxu0 0.0
        %603 = vmatprep.subr.mxu0 0.0
        %604 = vmatpush1.msra.mxu0 0.0
        %605 = vmatprep.subr.mxu0 0.0
        %606 = vmatpush1.msra.mxu0 0.0
        %607 = vmatprep.subr.mxu0 0.0
        %608 = vmatpush1.msra.mxu0 0.0
        %609 = vmatprep.subr.mxu0 0.0
        %610 = vmatpush1.msra.mxu0 0.0
        %611 = vmatprep.subr.mxu0 0.0
        %612 = vmatpush1.msra.mxu0 0.0
        %613 = vmatprep.subr.mxu0 0.0
        %614 = vmatpush1.msra.mxu0 0.0
        %615 = vmatprep.subr.mxu0 0.0
        %616 = vmatpush1.msra.mxu0 0.0
        %617 = vmatprep.subr.mxu0 0.0
        %618 = vmatpush1.msra.mxu0 0.0
        %619 = vmatprep.subr.mxu0 0.0
        %620 = vmatpush1.msra.mxu0 0.0
        %621 = vmatprep.subr.mxu0 0.0
        %622 = vmatpush1.msra.mxu0 0.0
        %623 = vmatprep.subr.mxu0 0.0
        %624 = vmatpush1.msra.mxu0 0.0
        %625 = vmatprep.subr.mxu0 0.0
        %626 = vmatpush1.msra.mxu0 0.0
        %627 = vmatprep.mubr.f32.mxu0 0.0
        %628 = vmatmul.mubr.f32.gmra.mrb[0].mxu0 %v561
        %v629 = vpop.f32.mrb[0].mxu0
        %v630 = vadd.f32 0.0, %v629
        %v631 = vpop.f32.mrb[0].mxu0
        %632 = vdwg.mxu0
        %v633 = vsub.f32 %v503, %v630
        %v634 = vmul.f32 %v633, 1.442695
        %v635 = vpow.pop %v634
        %v636 = vlaneseq
        %v637 = vshrl.u32 %v636, 7
        %v638 = vsub.s32 0, %v637
        %v639 = vrot.slane %v635, %v638
        %v640 = vmul.f32 %v515, %v639
        %641 = vmatprep.subr.mxu0 0.0
        %642 = vmatpush1.msra.mxu0 %v353
        %643 = vmatprep.subr.mxu0 0.0
        %644 = vmatpush1.msra.mxu0 %v358
        %645 = vmatprep.subr.mxu0 0.0
        %646 = vmatpush1.msra.mxu0 %v363
        %647 = vmatprep.subr.mxu0 0.0
        %648 = vmatpush1.msra.mxu0 %v368
        %649 = vmatprep.subr.mxu0 0.0
        %650 = vmatpush1.msra.mxu0 %v373
        %651 = vmatprep.subr.mxu0 0.0
        %652 = vmatpush1.msra.mxu0 %v378
        %653 = vmatprep.subr.mxu0 0.0
        %654 = vmatpush1.msra.mxu0 %v383
        %655 = vmatprep.subr.mxu0 0.0
        %656 = vmatpush1.msra.mxu0 %v388
        %657 = vmatprep.subr.mxu0 0.0
        %658 = vmatpush1.msra.mxu0 %v393
        %659 = vmatprep.subr.mxu0 0.0
        %660 = vmatpush1.msra.mxu0 %v398
        %661 = vmatprep.subr.mxu0 0.0
        %662 = vmatpush1.msra.mxu0 %v403
        %663 = vmatprep.subr.mxu0 0.0
        %664 = vmatpush1.msra.mxu0 %v408
        %665 = vmatprep.subr.mxu0 0.0
        %666 = vmatpush1.msra.mxu0 %v413
        %667 = vmatprep.subr.mxu0 0.0
        %668 = vmatpush1.msra.mxu0 %v418
        %669 = vmatprep.subr.mxu0 0.0
        %670 = vmatpush1.msra.mxu0 %v423
        %671 = vmatprep.subr.mxu0 0.0
        %672 = vmatpush1.msra.mxu0 %v428
        %673 = vmatprep.subr.mxu0 0.0
        %674 = vmatpush1.msra.mxu0 0.0
        %675 = vmatprep.subr.mxu0 0.0
        %676 = vmatpush1.msra.mxu0 0.0
        %677 = vmatprep.subr.mxu0 0.0
        %678 = vmatpush1.msra.mxu0 0.0
        %679 = vmatprep.subr.mxu0 0.0
        %680 = vmatpush1.msra.mxu0 0.0
        %681 = vmatprep.subr.mxu0 0.0
        %682 = vmatpush1.msra.mxu0 0.0
        %683 = vmatprep.subr.mxu0 0.0
        %684 = vmatpush1.msra.mxu0 0.0
        %685 = vmatprep.subr.mxu0 0.0
        %686 = vmatpush1.msra.mxu0 0.0
        %687 = vmatprep.subr.mxu0 0.0
        %688 = vmatpush1.msra.mxu0 0.0
        %689 = vmatprep.subr.mxu0 0.0
        %690 = vmatpush1.msra.mxu0 0.0
        %691 = vmatprep.subr.mxu0 0.0
        %692 = vmatpush1.msra.mxu0 0.0
        %693 = vmatprep.subr.mxu0 0.0
        %694 = vmatpush1.msra.mxu0 0.0
        %695 = vmatprep.subr.mxu0 0.0
        %696 = vmatpush1.msra.mxu0 0.0
        %697 = vmatprep.subr.mxu0 0.0
        %698 = vmatpush1.msra.mxu0 0.0
        %699 = vmatprep.subr.mxu0 0.0
        %700 = vmatpush1.msra.mxu0 0.0
        %701 = vmatprep.subr.mxu0 0.0
        %702 = vmatpush1.msra.mxu0 0.0
        %703 = vmatprep.subr.mxu0 0.0
        %704 = vmatpush1.msra.mxu0 0.0
        %705 = vmatprep.mubr.f32.mxu0 0.0
        %706 = vmatmul.mubr.f32.gmra.mrb[0].mxu0 %v640
        %v707 = vpop.f32.mrb[0].mxu0
        %v708 = vadd.f32 0.0, %v707
        %v709 = vpop.f32.mrb[0].mxu0
        %710 = vdwg.mxu0
        %v711 = vsub.f32 %v516, %v524
        %v712 = vmul.f32 %v711, 1.442695
        %v713 = vpow.pop %v712
        %v714 = vld [vmem:[#allocation3] sm:$0xff]
        %716 = vset.pattern.permute.xlu0 0
        %717 = vperm.xlu0 %716, %v713
        %v718 = vpop.permute.xlu0 %717
        %v720 = vmul.f32 %v718, %v714
        %v721 = vadd.f32 %v720, %v708
        %722 = vst [vmem:[#allocation3] sm:$0xff] %v721
        %p723 = scmp.eq.s32.totalorder %s20, 1
        // Predicated region
        $region37: #{tpu_custom_call.1} parent=31 // pred_check
          %p724 = pneg %p723
        $region38: #{tpu_custom_call.1} parent=31 // pred_check_branch
          %726 = sbr.rel (%p724) target = $region40
        $region39: #{tpu_custom_call.1} parent=31 // pred_region
          %v727 = vld [vmem:[#allocation3] sm:$0xff]
          %v728 = vadd.s32 %v508, 8
          %v729 = vadd.s32 %v508, 16
          %v730 = vadd.s32 %v508, 24
          %v731 = vadd.s32 %v508, 32
          %v732 = vadd.s32 %v508, 40
          %v733 = vadd.s32 %v508, 48
          %v734 = vadd.s32 %v508, 56
          %v735 = vadd.s32 %v508, 64
          %v736 = vadd.s32 %v508, 72
          %v737 = vadd.s32 %v508, 80
          %v738 = vadd.s32 %v508, 88
          %v739 = vadd.s32 %v508, 96
          %v740 = vadd.s32 %v508, 104
          %v741 = vadd.s32 %v508, 112
          %v742 = vadd.s32 %v508, 120
          %vm743 = vcmp.eq.s32.totalorder %v508, 1
          %vm744 = vcmp.eq.s32.totalorder %v728, 1
          %vm745 = vcmp.eq.s32.totalorder %v729, 1
          %vm746 = vcmp.eq.s32.totalorder %v730, 1
          %vm747 = vcmp.eq.s32.totalorder %v731, 1
          %vm748 = vcmp.eq.s32.totalorder %v732, 1
          %vm749 = vcmp.eq.s32.totalorder %v733, 1
          %vm750 = vcmp.eq.s32.totalorder %v734, 1
          %vm751 = vcmp.eq.s32.totalorder %v735, 1
          %vm752 = vcmp.eq.s32.totalorder %v736, 1
          %vm753 = vcmp.eq.s32.totalorder %v737, 1
          %vm754 = vcmp.eq.s32.totalorder %v738, 1
          %vm755 = vcmp.eq.s32.totalorder %v739, 1
          %vm756 = vcmp.eq.s32.totalorder %v740, 1
          %vm757 = vcmp.eq.s32.totalorder %v741, 1
          %vm758 = vcmp.eq.s32.totalorder %v742, 1
          %v759 = vsel %vm743, 1, 0
          %v760 = vsel %vm744, 1, 0
          %v761 = vsel %vm745, 1, 0
          %v762 = vsel %vm746, 1, 0
          %v763 = vsel %vm747, 1, 0
          %v764 = vsel %vm748, 1, 0
          %v765 = vsel %vm749, 1, 0
          %v766 = vsel %vm750, 1, 0
          %v767 = vsel %vm751, 1, 0
          %v768 = vsel %vm752, 1, 0
          %v769 = vsel %vm753, 1, 0
          %v770 = vsel %vm754, 1, 0
          %v771 = vsel %vm755, 1, 0
          %v772 = vsel %vm756, 1, 0
          %v773 = vsel %vm757, 1, 0
          %v774 = vsel %vm758, 1, 0
          %v775 = vcvt.s32.f32 %v759
          %v776 = vcvt.s32.f32 %v760
          %v777 = vcvt.s32.f32 %v761
          %v778 = vcvt.s32.f32 %v762
          %v779 = vcvt.s32.f32 %v763
          %v780 = vcvt.s32.f32 %v764
          %v781 = vcvt.s32.f32 %v765
          %v782 = vcvt.s32.f32 %v766
          %v783 = vcvt.s32.f32 %v767
          %v784 = vcvt.s32.f32 %v768
          %v785 = vcvt.s32.f32 %v769
          %v786 = vcvt.s32.f32 %v770
          %v787 = vcvt.s32.f32 %v771
          %v788 = vcvt.s32.f32 %v772
          %v789 = vcvt.s32.f32 %v773
          %v790 = vcvt.s32.f32 %v774
          %791 = vmatprep.subr.mxu0 0.0
          %792 = vmatpush1.msra.mxu0 %v775
          %793 = vmatprep.subr.mxu0 0.0
          %794 = vmatpush1.msra.mxu0 %v776
          %795 = vmatprep.subr.mxu0 0.0
          %796 = vmatpush1.msra.mxu0 %v777
          %797 = vmatprep.subr.mxu0 0.0
          %798 = vmatpush1.msra.mxu0 %v778
          %799 = vmatprep.subr.mxu0 0.0
          %800 = vmatpush1.msra.mxu0 %v779
          %801 = vmatprep.subr.mxu0 0.0
          %802 = vmatpush1.msra.mxu0 %v780
          %803 = vmatprep.subr.mxu0 0.0
          %804 = vmatpush1.msra.mxu0 %v781
          %805 = vmatprep.subr.mxu0 0.0
          %806 = vmatpush1.msra.mxu0 %v782
          %807 = vmatprep.subr.mxu0 0.0
          %808 = vmatpush1.msra.mxu0 %v783
          %809 = vmatprep.subr.mxu0 0.0
          %810 = vmatpush1.msra.mxu0 %v784
          %811 = vmatprep.subr.mxu0 0.0
          %812 = vmatpush1.msra.mxu0 %v785
          %813 = vmatprep.subr.mxu0 0.0
          %814 = vmatpush1.msra.mxu0 %v786
          %815 = vmatprep.subr.mxu0 0.0
          %816 = vmatpush1.msra.mxu0 %v787
          %817 = vmatprep.subr.mxu0 0.0
          %818 = vmatpush1.msra.mxu0 %v788
          %819 = vmatprep.subr.mxu0 0.0
          %820 = vmatpush1.msra.mxu0 %v789
          %821 = vmatprep.subr.mxu0 0.0
          %822 = vmatpush1.msra.mxu0 %v790
          %823 = vmatprep.subr.mxu0 0.0
          %824 = vmatpush1.msra.mxu0 0.0
          %825 = vmatprep.subr.mxu0 0.0
          %826 = vmatpush1.msra.mxu0 0.0
          %827 = vmatprep.subr.mxu0 0.0
          %828 = vmatpush1.msra.mxu0 0.0
          %829 = vmatprep.subr.mxu0 0.0
          %830 = vmatpush1.msra.mxu0 0.0
          %831 = vmatprep.subr.mxu0 0.0
          %832 = vmatpush1.msra.mxu0 0.0
          %833 = vmatprep.subr.mxu0 0.0
          %834 = vmatpush1.msra.mxu0 0.0
          %835 = vmatprep.subr.mxu0 0.0
          %836 = vmatpush1.msra.mxu0 0.0
          %837 = vmatprep.subr.mxu0 0.0
          %838 = vmatpush1.msra.mxu0 0.0
          %839 = vmatprep.subr.mxu0 0.0
          %840 = vmatpush1.msra.mxu0 0.0
          %841 = vmatprep.subr.mxu0 0.0
          %842 = vmatpush1.msra.mxu0 0.0
          %843 = vmatprep.subr.mxu0 0.0
          %844 = vmatpush1.msra.mxu0 0.0
          %845 = vmatprep.subr.mxu0 0.0
          %846 = vmatpush1.msra.mxu0 0.0
          %847 = vmatprep.subr.mxu0 0.0
          %848 = vmatpush1.msra.mxu0 0.0
          %849 = vmatprep.subr.mxu0 0.0
          %850 = vmatpush1.msra.mxu0 0.0
          %851 = vmatprep.subr.mxu0 0.0
          %852 = vmatpush1.msra.mxu0 0.0
          %853 = vmatprep.subr.mxu0 0.0
          %854 = vmatpush1.msra.mxu0 0.0
          %855 = vmatprep.mubr.f32.mxu0 0.0
          %856 = vmatmul.mubr.f32.gmra.mrb[0].mxu0 %v727
          %v857 = vpop.f32.mrb[0].mxu0
          %v858 = vadd.f32 1e-16, %v857
          %v859 = vpop.f32.mrb[0].mxu0
          %860 = vdwg.mxu0
          %v861 = vrcp.pop %v858
          %863 = vset.pattern.permute.xlu0 0
          %864 = vperm.xlu0 %863, %v861
          %v865 = vpop.permute.xlu0 %864
          %v867 = vmul.f32 %v727, %v865
          %868 = vst [vmem:[#allocation3] sm:$0xff] %v867
        $region40: #{tpu_custom_call.1} parent=31 // pred_fallthru
          _
        // Predicated region
        $region41: #{tpu_custom_call.1} parent=31 // pred_check
          %p869 = pneg %p123
        $region42: #{tpu_custom_call.1} parent=31 // pred_check_branch
          %871 = sbr.rel (%p869) target = $region44
        $region43: #{tpu_custom_call.1} parent=31 // pred_region
          %s873 = ssub.s32 128, 128
          %874 = vsyncadd [#allocation4], %s873
          %s875 = smul.addr %s19, 128
          %s876 = scalar_lea.hbm %s3, %s875
          %s878 = sshll.u32 [#allocation3], 4
          %s879 = int_to_ptr.vmem [resolvable:$true] %s878
          %881 = dma.vmem_to_hbm [thread:$0]  %s879, 128, %s876, [#allocation4]
        $region44: #{tpu_custom_call.1} parent=31 // pred_fallthru
          _
        // Predicated region
        $region45: #{tpu_custom_call.1} parent=31 // pred_check
          %p882 = pneg %p123
        $region46: #{tpu_custom_call.1} parent=31 // pred_check_branch
          %884 = sbr.rel (%p882) target = $region48
        $region47: #{tpu_custom_call.1} parent=31 // pred_region
          %885 = dma.done [#allocation4], 128
        $region48: #{tpu_custom_call.1} parent=31 // pred_fallthru
          _
      $region32: #{tpu_custom_call.1} parent=5 // pred_fallthru
        _
      %p886 = scmp.le.s32.totalorder 2, %s10
      // Predicated region
      $region49: #{tpu_custom_call.1} parent=5 // pred_check
        %p887 = pneg %p886
      $region50: #{tpu_custom_call.1} parent=5 // pred_check_branch
        %889 = sbr.rel (%p887) target = $region52
      $region51: #{tpu_custom_call.1} parent=5 // pred_region
        %s890 = ssub.s32 %s10, 2
      $region52: #{tpu_custom_call.1} parent=5 // pred_fallthru
        _
    $region6: #{tpu_custom_call.1} parent=1 // loop_footer
      %s14 = sadd.s32 1, %s10
    $region7: #{tpu_custom_call.1} parent=1 // loop_footer_branch
      %9 = sbr.rel target = $region3
    $region8: #{tpu_custom_call.1} parent=1 // loop_exit
      _
    %891 = vsyncpa [#allocation4], 1
    %s892 = scalar_lea.sflag [#allocation4], 1
    %893 = vsyncpa %s892, 1

</llo_original>
